<compile_context>
chip_gen: v5e
topology: v5e:2x2
jax: 0.10.0
libtpu: 0.0.40
codegen_flags: <defaults>
</compile_context>

<pallas_src>
import functools

import jax
import jax.numpy as jnp
import numpy as np
from jax.experimental import pallas as pl
from jax.experimental.pallas import tpu as pltpu


# ----------------------------- Pallas kernels ------------------------------

def diffusion_kernel(x_ref, phi_ref, phiwt_ref, coef_ref, out_ref):
    """Spectral diffusion: out = phi @ (exp(-lam (x) t) * ((deg*phi)^T @ x)).

    (deg*phi)^T and exp(-lam (x) t) are precomputed on the host, so the kernel
    is two MXU matmuls plus one VPU multiply (no in-kernel transpose / exp).
    """
    # TODO(synk): exact mass-matrix weighting of the original Diffusion_layer is
    # not available; degree-weighted spectral projection is used here.
    spec = jnp.dot(phiwt_ref[...], x_ref[...],
                   preferred_element_type=jnp.float32)              # [K, Hp]
    out = jnp.dot(phi_ref[...], coef_ref[...] * spec,
                  preferred_element_type=jnp.float32)               # [Np, Hp]
    out_ref[...] = out.astype(out_ref.dtype)


def gad_kernel(h_ref, x_ref, s_ref, wp01_ref, wp2_ref, bp_ref, wl_ref, bl_ref,
               out_ref, *, tm):
    """One row tile of: DGN(simple) x 2 directions + MLP_last + residual.

    s_ref holds the tile-interleaved stack [A_hat; B1-diag(fd1); B2-diag(fd2)]
    rows for this tile, so all message passing is a single MXU matmul.
    The graph-size norm is pre-folded into wp*/bp on the host.
    """
    f32, bf16 = jnp.float32, jnp.bfloat16

    h = h_ref[...]                                                  # [Np, Hp] bf16, resident
    # one fused message-passing matmul: (3*tm, Np) @ (Np, Hp)
    m = jnp.dot(s_ref[...], h, preferred_element_type=f32)          # [3*tm, Hp] f32
    m_mean = m[0 * tm:1 * tm].astype(bf16)
    m_dir0 = m[1 * tm:2 * tm].astype(bf16)
    m_dir1 = m[2 * tm:3 * tm].astype(bf16)

    # this grid step's rows of the resident diffusion output
    row0 = pl.multiple_of(pl.program_id(0) * tm, tm)
    h_t = h_ref[pl.ds(row0, tm), :]                                 # [tm, Hp] bf16

    # direction-invariant DGN pre-transform (fused): [h_t | m_mean] @ [wp0; wp1]
    base = (jnp.dot(jnp.concatenate([h_t, m_mean], axis=1), wp01_ref[...],
                    preferred_element_type=f32) + bp_ref[...])
    wp2 = wp2_ref[...]
    d0 = jnp.maximum(base + jnp.dot(m_dir0, wp2, preferred_element_type=f32),
                     0.0).astype(bf16)
    d1 = jnp.maximum(base + jnp.dot(m_dir1, wp2, preferred_element_type=f32),
                     0.0).astype(bf16)

    # MLP_last over cat([diffusion_out, dgn_0, dgn_1], 1) as a single matmul
    pre = (jnp.dot(jnp.concatenate([h_t, d0, d1], axis=1), wl_ref[...],
                   preferred_element_type=f32) + bl_ref[...])
    out_ref[...] = x_ref[...] + jnp.maximum(pre, 0.0)


# ------------------------------ JAX wrapper --------------------------------

def _round_up(x, m):
    return (x + m - 1) // m * m


def _vmem_capacity_bytes():
    """Hardened physical-VMEM query (falls back via device kind, then 64 MiB)."""
    info = None
    try:
        info = pltpu.get_tpu_info()
    except Exception:
        info = None
    for name in ("vmem_capacity_bytes", "vmem_size_bytes", "vmem_bytes"):
        v = getattr(info, name, None)
        if isinstance(v, (int, np.integer)) and int(v) > 0:
            return int(v)
    try:
        kind = jax.devices()[0].device_kind.lower()
        if ("v5" in kind) or ("v6" in kind):
            return 128 << 20
    except Exception:
        pass
    return 64 << 20


def _pick_row_tile(n, hp, vmem_limit):
    """Largest row tile whose full working set fits comfortably in the limit."""
    tm = 256 if vmem_limit >= (96 << 20) else 128
    if n <= tm:
        return _round_up(max(n, 1), 16)

    budget = int(vmem_limit * 0.8)
    weights = 6 * hp * hp * 2 + 4 * hp * 4            # wp01+wp2+wl (bf16) + biases

    def working_set(t):
        np_ = _round_up(n, max(t, 128))
        resident_h = np_ * hp * 2                     # diffusion output (single buffer)
        s_buf = 2 * 3 * t * np_ * 2                   # stacked operators, double-buffered
        io_buf = 2 * (t * hp * 4) * 2                 # x tile + out tile, double-buffered
        interm = 4 * (3 * t * hp * 4)                 # m + base/d0/d1/pre (f32)
        return resident_h + weights + s_buf + io_buf + interm

    while tm > 16 and working_set(tm) > budget:
        tm //= 2
    return max(tm, 16)


def prepare_gad_constants(k_eig_vec, k_eig_val, t_diff, node_deg_vec,
                          a_mean, b1, b2, fdig1, fdig2, norm_n,
                          w_post, b_post, w_last, b_last):
    """Graph/parameter-only precompute.  Callers should cache the returned dict
    across forward passes on the same graph/parameters (dominant host cost)."""
    f32, bf16 = jnp.float32, jnp.bfloat16
    a_mean = jnp.asarray(a_mean, f32)
    w_post = jnp.asarray(w_post, f32)
    w_last = jnp.asarray(w_last, f32)
    N = a_mean.shape[0]
    H = w_post.shape[1]
    K = jnp.asarray(k_eig_vec).shape[1]

    Hp = _round_up(H, 128)                              # lane-dense feature dim
    vmem_limit = min((_vmem_capacity_bytes() * 7) // 8, 112 << 20)
    tm = _pick_row_tile(N, Hp, vmem_limit)
    Np = _round_up(N, max(tm, 128)) if N > tm else tm
    n_tiles = Np // tm

    def pad2(a, rows, cols, dtype=f32):
        a = jnp.asarray(a, f32)
        return jnp.pad(a, ((0, rows - a.shape[0]),
                           (0, cols - a.shape[1]))).astype(dtype)

    # ---- diffusion precompute (layout plumbing only) -----------------------
    phi = pad2(k_eig_vec, Np, K)                                     # [Np,K]
    deg = jnp.pad(jnp.asarray(node_deg_vec, f32), (0, Np - N))       # [Np]
    phi_w_t = (deg[:, None] * phi).T                                 # [K,Np]
    t_pad = jnp.pad(jnp.asarray(t_diff, f32), (0, Hp - H))           # [Hp]
    coef = jnp.exp(-jnp.asarray(k_eig_val, f32)[:, None] * t_pad[None, :])  # [K,Hp]

    # ---- message-passing operators: fold F_dig, cast bf16 BEFORE stacking,
    # tile-interleave so grid step i reads one contiguous (3*tm, Np) block ----
    b1p = jnp.asarray(b1, f32) - jnp.diag(jnp.asarray(fdig1, f32))
    b2p = jnp.asarray(b2, f32) - jnp.diag(jnp.asarray(fdig2, f32))
    ops = jnp.stack([pad2(a_mean, Np, Np, bf16),
                     pad2(b1p, Np, Np, bf16),
                     pad2(b2p, Np, Np, bf16)])
    s = (ops.reshape(3, n_tiles, tm, Np).transpose(1, 0, 2, 3)
            .reshape(3 * Np, Np))

    # ---- fold positive single-graph norm into W_post/b_post, stack weights ---
    norm_c = jnp.asarray(norm_n, f32).reshape(-1)[0]
    wp0 = pad2(w_post[0:H] * norm_c, Hp, Hp, bf16)
    wp1 = pad2(w_post[H:2 * H] * norm_c, Hp, Hp, bf16)
    wp2 = pad2(w_post[2 * H:3 * H] * norm_c, Hp, Hp, bf16)
    wl0 = pad2(w_last[0:H], Hp, Hp, bf16)
    wl1 = pad2(w_last[H:2 * H], Hp, Hp, bf16)
    wl2 = pad2(w_last[2 * H:3 * H], Hp, Hp, bf16)
    wp01 = jnp.concatenate([wp0, wp1], axis=0)                       # [2Hp,Hp]
    wl = jnp.concatenate([wl0, wl1, wl2], axis=0)                    # [3Hp,Hp]
    bp = jnp.pad(jnp.asarray(b_post, f32) * norm_c, (0, Hp - H)).reshape(1, Hp)
    bl = jnp.pad(jnp.asarray(b_last, f32), (0, Hp - H)).reshape(1, Hp)

    return dict(N=N, H=H, Hp=Hp, tm=tm, Np=Np, n_tiles=n_tiles,
                vmem_limit=vmem_limit, phi=phi, phi_w_t=phi_w_t, coef=coef,
                s=s, wp01=wp01, wp2=wp2, bp=bp, wl=wl, bl=bl)


def gad_layer_apply(node_fts, c):
    f32, bf16 = jnp.float32, jnp.bfloat16
    N, H, Hp = c["N"], c["H"], c["Hp"]
    tm, Np, n_tiles = c["tm"], c["Np"], c["n_tiles"]

    x = jnp.pad(jnp.asarray(node_fts, f32), ((0, Np - N), (0, Hp - H)))  # [Np,Hp]

    vmem = pl.BlockSpec(memory_space=pltpu.MemorySpace.VMEM)

    # Kernel 1: spectral diffusion (small arrays; single block, no grid).
    # TODO(synk): on single-TC parts (v5e/v6e) this could be fused into the gad
    # kernel as a pl.when(program_id==0) prologue; kept separate so the row-tile
    # grid stays "parallel" (2-TC sharding on v7x).
    h = pl.pallas_call(
        diffusion_kernel,
        out_shape=jax.ShapeDtypeStruct((Np, Hp), bf16),
        in_specs=[vmem] * 4,
        out_specs=vmem,
        compiler_params=pltpu.CompilerParams(vmem_limit_bytes=c["vmem_limit"]),
    )(x, c["phi"], c["phi_w_t"], c["coef"])

    # Kernel 2: fused DGN x2 + MLP_last + residual, tiled over row tiles of N.
    full = lambda i: (0, 0)
    tile = lambda i: (i, 0)

    def run(single_buffer):
        const_kw = {"pipeline_mode": pl.Buffered(1)} if single_buffer else {}
        in_specs = [
            pl.BlockSpec((Np, Hp), full, **const_kw),       # h (diffusion out), resident
            pl.BlockSpec((tm, Hp), tile),                   # node_fts tile (residual)
            pl.BlockSpec((3 * tm, Np), tile),               # stacked [A_hat; B1'; B2']
            pl.BlockSpec((2 * Hp, Hp), full, **const_kw),   # [wp0; wp1] (norm folded)
            pl.BlockSpec((Hp, Hp), full, **const_kw),       # wp2 (norm folded)
            pl.BlockSpec((1, Hp), full, **const_kw),        # b_post (norm folded)
            pl.BlockSpec((3 * Hp, Hp), full, **const_kw),   # [wl0; wl1; wl2]
            pl.BlockSpec((1, Hp), full, **const_kw),        # b_last
        ]
        return pl.pallas_call(
            functools.partial(gad_kernel, tm=tm),
            out_shape=jax.ShapeDtypeStruct((Np, Hp), f32),
            grid=(n_tiles,),
            in_specs=in_specs,
            out_specs=pl.BlockSpec((tm, Hp), tile),
            compiler_params=pltpu.CompilerParams(
                dimension_semantics=("parallel",),
                vmem_limit_bytes=c["vmem_limit"]),
        )(h, x, c["s"], c["wp01"], c["wp2"], c["bp"], c["wl"], c["bl"])

    try:
        out = run(single_buffer=True)
    except Exception:
        # pipeline_mode=pl.Buffered(1) not accepted by this JAX/Mosaic version;
        # fall back to default double-buffering (semantics identical).
        out = run(single_buffer=False)

    return out[:N, :H]


def gad_layer_forward(node_fts, k_eig_vec, k_eig_val, t_diff, node_deg_vec,
                      a_mean, b1, b2, fdig1, fdig2, norm_n,
                      w_post, b_post, w_last, b_last):
    consts = prepare_gad_constants(k_eig_vec, k_eig_val, t_diff, node_deg_vec,
                                   a_mean, b1, b2, fdig1, fdig2, norm_n,
                                   w_post, b_post, w_last, b_last)
    return gad_layer_apply(node_fts, consts)


# --------------------------- pure-JAX reference -----------------------------

def _reference(node_fts, phi, lam, t, deg, a_mean, b1, b2, fd1, fd2, norm_c,
               w_post, b_post, w_last, b_last):
    spec = phi.T @ (deg[:, None] * node_fts)
    h = phi @ (jnp.exp(-lam[:, None] * t[None, :]) * spec)
    m_mean = a_mean @ h

    def dgn(bmat, fd):
        m_dir = bmat @ h - fd[:, None] * h
        pre = jnp.concatenate([h, m_mean, m_dir], axis=1) @ w_post + b_post
        return jnp.maximum(pre, 0.0) * norm_c

    d0 = dgn(b1, fd1)
    d1 = dgn(b2, fd2)
    pre = jnp.concatenate([h, d0, d1], axis=1) @ w_last + b_last
    return node_fts + jnp.maximum(pre, 0.0)


# --------------------------- example / smoke test --------------------------

if __name__ == "__main__":
    N, H, K = 512, 32, 8    # num_nodes, hid_dim, Laplacian eigenpairs
    key = jax.random.PRNGKey(0)
    k_x, k_wp, k_bp, k_wl, k_bl = jax.random.split(key, 5)

    node_fts = jax.random.normal(k_x, (N, H), dtype=jnp.float32)

    # ring-graph operators (dense, host-side glue in numpy)
    idx = np.arange(N)
    adj = np.zeros((N, N), np.float32)
    adj[idx, (idx + 1) % N] = 1.0
    adj[idx, (idx - 1) % N] = 1.0
    node_deg_vec = adj.sum(axis=1)
    a_mean = adj / node_deg_vec[:, None]                 # row-normalized adjacency

    lap_mat = np.diag(node_deg_vec) - adj
    eig_val, eig_vec = np.linalg.eigh(lap_mat)
    k_eig_val = eig_val[:K].astype(np.float32)
    k_eig_vec = eig_vec[:, :K].astype(np.float32)

    def direction_field(col):
        phi_c = eig_vec[:, col]
        b = adj * (phi_c[None, :] - phi_c[:, None])      # B[u,v] = phi[v]-phi[u] on edges
        return b.astype(np.float32), b.sum(axis=1).astype(np.float32)

    b1, fdig1 = direction_field(1)
    b2, fdig2 = direction_field(2)

    norm_n = float(1.0 / np.sqrt(np.float32(N)))         # single-graph snorm (> 0)

    t_diff = jnp.linspace(0.1, 1.0, H, dtype=jnp.float32)
    w_post = 0.1 * jax.random.normal(k_wp, (3 * H, H), dtype=jnp.float32)
    b_post = 0.1 * jax.random.normal(k_bp, (H,), dtype=jnp.float32)
    w_last = 0.1 * jax.random.normal(k_wl, (3 * H, H), dtype=jnp.float32)
    b_last = 0.1 * jax.random.normal(k_bl, (H,), dtype=jnp.float32)

    out = gad_layer_forward(node_fts, jnp.asarray(k_eig_vec), jnp.asarray(k_eig_val),
                            t_diff, jnp.asarray(node_deg_vec), jnp.asarray(a_mean),
                            jnp.asarray(b1), jnp.asarray(b2),
                            jnp.asarray(fdig1), jnp.asarray(fdig2), norm_n,
                            w_post, b_post, w_last, b_last)
    out = jax.block_until_ready(out)
    assert out.shape == (N, H) and out.dtype == jnp.float32

    ref = _reference(node_fts, jnp.asarray(k_eig_vec), jnp.asarray(k_eig_val),
                     t_diff, jnp.asarray(node_deg_vec), jnp.asarray(a_mean),
                     jnp.asarray(b1), jnp.asarray(b2),
                     jnp.asarray(fdig1), jnp.asarray(fdig2), jnp.float32(norm_n),
                     w_post, b_post, w_last, b_last)
    err = float(jnp.max(jnp.abs(out - ref)))
    scale = float(jnp.max(jnp.abs(ref)))
    tol = 5e-2 + 3e-2 * scale                             # bf16 operator / h path
    assert np.isfinite(err) and err < tol, f"max abs err {err} (tol {tol})"
    print("KERNEL_OK")
</pallas_src>

<mosaic_0001>
module attributes {stable_mosaic.version = 11 : i64} {
  func.func @diffusion_kernel(%arg0: memref<512x128xf32, #tpu.memory_space<vmem>>, %arg1: memref<512x8xf32, #tpu.memory_space<vmem>>, %arg2: memref<8x512xf32, #tpu.memory_space<vmem>>, %arg3: memref<8x128xf32, #tpu.memory_space<vmem>>, %arg4: memref<512x128xbf16, #tpu.memory_space<vmem>>) attributes {dimension_semantics = [], scalar_prefetch = 0 : i64, scratch_operands = 0 : i64, tpu.core_type = #tpu.core_type<tc>} {
    %c0 = arith.constant 0 : index
    %c0_0 = arith.constant 0 : index
    %0 = vector.load %arg2[%c0, %c0_0] : memref<8x512xf32, #tpu.memory_space<vmem>>, vector<8x512xf32>
    %c0_1 = arith.constant 0 : index
    %c0_2 = arith.constant 0 : index
    %1 = vector.load %arg0[%c0_1, %c0_2] : memref<512x128xf32, #tpu.memory_space<vmem>>, vector<512x128xf32>
    %cst = arith.constant dense<0.000000e+00> : vector<8x128xf32>
    %2 = tpu.matmul %0, %1, %cst {dimension_numbers = #tpu.dot_dimension_numbers<[1], [0], [0], [1], [0, 0, 1, 1], [], []>} : vector<8x512xf32>, vector<512x128xf32>, vector<8x128xf32> -> vector<8x128xf32>
    %c0_3 = arith.constant 0 : index
    %c0_4 = arith.constant 0 : index
    %3 = vector.load %arg1[%c0_3, %c0_4] : memref<512x8xf32, #tpu.memory_space<vmem>>, vector<512x8xf32>
    %c0_5 = arith.constant 0 : index
    %c0_6 = arith.constant 0 : index
    %4 = vector.load %arg3[%c0_5, %c0_6] : memref<8x128xf32, #tpu.memory_space<vmem>>, vector<8x128xf32>
    %5 = arith.mulf %4, %2 : vector<8x128xf32>
    %cst_7 = arith.constant dense<0.000000e+00> : vector<512x128xf32>
    %6 = tpu.matmul %3, %5, %cst_7 {dimension_numbers = #tpu.dot_dimension_numbers<[1], [0], [0], [1], [0, 0, 1, 1], [], []>} : vector<512x8xf32>, vector<8x128xf32>, vector<512x128xf32> -> vector<512x128xf32>
    %7 = arith.truncf %6 : vector<512x128xf32> to vector<512x128xbf16>
    %c0_8 = arith.constant 0 : index
    %c0_9 = arith.constant 0 : index
    %8 = vector.load %arg4[%c0_8, %c0_9] : memref<512x128xbf16, #tpu.memory_space<vmem>>, vector<512x128xbf16>
    tpu.vector_store %arg4[%c0_8, %c0_9], %7 {strides = array<i32>} : memref<512x128xbf16, #tpu.memory_space<vmem>>, vector<512x128xbf16>,
    return
  }
}

</mosaic_0001>

<llo_original>
// kernel: tpu_custom_call.1
$region0: #{tpu_custom_call.1}
  #allocation0 [shape = 'u32[]', space=smem, size = 0x4, offset = 0x4, fixed_abs, tag = 'smem constant byte address 0x4 - core index']
  #allocation1 [shape = 'u32[72,128]{1,0:T(1,128)}', space=vmem, size = 0x9000, scoped, tag = 'internal scratch']
  %s0 = inlined_call_operand.vmem [shape: f32[512,128], index: 0, kind: input, shape index: {}]
  %s1 = inlined_call_operand.vmem [shape: f32[512,8], index: 1, kind: input, shape index: {}]
  %s2 = inlined_call_operand.vmem [shape: f32[8,512], index: 2, kind: input, shape index: {}]
  %s3 = inlined_call_operand.hbm [shape: f32[8,128], index: 3, kind: input, shape index: {}]
  %s4 = inlined_call_operand.hbm [shape: bf16[512,128], index: 4, kind: output, shape index: {}]
  %s5 = sld [smem:[#allocation0]]
  $region30: #{tpu_custom_call.1} parent=0
    _
  %s7 = ssub.s32 1, %s5
  %s8 = scalar_select 0, %s7, %s5
  $region1: #{tpu_custom_call.1} parent=0
    #allocation2 [shape = 'u8[4096]{0}', space=vmem, size = 0x1000, scoped, tag = 'input window, operand 3, single buffered']
    #allocation3 [shape = 's32[1]{0}', space=sflag, size = 0x4, scoped, tag = 'scoped memory for tpu_custom_call.1']
    #allocation4 [shape = 's32[1]{0}', space=sflag, size = 0x4, scoped, tag = 'scoped memory for tpu_custom_call.1']
    #allocation5 [shape = 'u8[131072]{0}', space=vmem, size = 0x20000, scoped, tag = 'output window, operand 0, single buffered']
    %9 = vsyncpa [#allocation3], 0
    %10 = vsyncpa [#allocation4], 0
    // Predicated region
    $region2: #{tpu_custom_call.1} parent=1 // pred_check
      _
    $region3: #{tpu_custom_call.1} parent=1 // pred_check_branch
      %12 = sbr.rel (0) target = $region5
    $region4: #{tpu_custom_call.1} parent=1 // pred_region
      _
    $region5: #{tpu_custom_call.1} parent=1 // pred_fallthru
      _
    // Predicated region
    $region6: #{tpu_custom_call.1} parent=1 // pred_check
      _
    $region7: #{tpu_custom_call.1} parent=1 // pred_check_branch
      %14 = sbr.rel (0) target = $region9
    $region8: #{tpu_custom_call.1} parent=1 // pred_region
      _
    $region9: #{tpu_custom_call.1} parent=1 // pred_fallthru
      _
    // Predicated region
    $region10: #{tpu_custom_call.1} parent=1 // pred_check
      _
    $region11: #{tpu_custom_call.1} parent=1 // pred_check_branch
      %16 = sbr.rel (0) target = $region13
    $region12: #{tpu_custom_call.1} parent=1 // pred_region
      _
    $region13: #{tpu_custom_call.1} parent=1 // pred_fallthru
      _
    // Predicated region
    $region14: #{tpu_custom_call.1} parent=1 // pred_check
      _
    $region15: #{tpu_custom_call.1} parent=1 // pred_check_branch
      %18 = sbr.rel (0) target = $region17
    $region16: #{tpu_custom_call.1} parent=1 // pred_region
      %20 = vsyncadd [#allocation3], 0
      %s22 = sshll.u32 %s3, 4
      %s23 = int_to_ptr.hbm [resolvable:$true] %s22
      %s24 = sshll.u32 [#allocation2], 4
      %s25 = int_to_ptr.vmem [resolvable:$true] %s24
      %27 = dma.hbm_to_vmem [thread:$0]  %s23, 128, %s25, [#allocation3]
    $region17: #{tpu_custom_call.1} parent=1 // pred_fallthru
      _
    // Predicated region
    $region18: #{tpu_custom_call.1} parent=1 // pred_check
      _
    $region19: #{tpu_custom_call.1} parent=1 // pred_check_branch
      %29 = sbr.rel (0) target = $region21
    $region20: #{tpu_custom_call.1} parent=1 // pred_region
      %31 = dma.done [#allocation3], 128
    $region21: #{tpu_custom_call.1} parent=1 // pred_fallthru
      _
    %v32 = vld [vmem:[%s2] sm:$0xff]
    %v33 = vld [vmem:[%s2 + $0x8] sm:$0xff]
    %v34 = vld [vmem:[%s2 + $0x10] sm:$0xff]
    %v35 = vld [vmem:[%s2 + $0x18] sm:$0xff]
    %v36 = vld [vmem:[%s0] sm:$0xff]
    %v37 = vld [vmem:[%s0 + $0x8] sm:$0xff]
    %v38 = vld [vmem:[%s0 + $0x10] sm:$0xff]
    %v39 = vld [vmem:[%s0 + $0x18] sm:$0xff]
    %v40 = vld [vmem:[%s0 + $0x20] sm:$0xff]
    %v41 = vld [vmem:[%s0 + $0x28] sm:$0xff]
    %v42 = vld [vmem:[%s0 + $0x30] sm:$0xff]
    %v43 = vld [vmem:[%s0 + $0x38] sm:$0xff]
    %v44 = vld [vmem:[%s0 + $0x40] sm:$0xff]
    %v45 = vld [vmem:[%s0 + $0x48] sm:$0xff]
    %v46 = vld [vmem:[%s0 + $0x50] sm:$0xff]
    %v47 = vld [vmem:[%s0 + $0x58] sm:$0xff]
    %v48 = vld [vmem:[%s0 + $0x60] sm:$0xff]
    %v49 = vld [vmem:[%s0 + $0x68] sm:$0xff]
    %v50 = vld [vmem:[%s0 + $0x70] sm:$0xff]
    %v51 = vld [vmem:[%s0 + $0x78] sm:$0xff]
    %v52 = vld [vmem:[%s0 + $0x80] sm:$0xff]
    %v53 = vld [vmem:[%s0 + $0x88] sm:$0xff]
    %v54 = vld [vmem:[%s0 + $0x90] sm:$0xff]
    %v55 = vld [vmem:[%s0 + $0x98] sm:$0xff]
    %v56 = vld [vmem:[%s0 + $0xa0] sm:$0xff]
    %v57 = vld [vmem:[%s0 + $0xa8] sm:$0xff]
    %v58 = vld [vmem:[%s0 + $0xb0] sm:$0xff]
    %v59 = vld [vmem:[%s0 + $0xb8] sm:$0xff]
    %v60 = vld [vmem:[%s0 + $0xc0] sm:$0xff]
    %v61 = vld [vmem:[%s0 + $0xc8] sm:$0xff]
    %v62 = vld [vmem:[%s0 + $0xd0] sm:$0xff]
    %v63 = vld [vmem:[%s0 + $0xd8] sm:$0xff]
    %v64 = vld [vmem:[%s0 + $0xe0] sm:$0xff]
    %v65 = vld [vmem:[%s0 + $0xe8] sm:$0xff]
    %v66 = vld [vmem:[%s0 + $0xf0] sm:$0xff]
    %v67 = vld [vmem:[%s0 + $0xf8] sm:$0xff]
    %v68 = vld [vmem:[%s0 + $0x100] sm:$0xff]
    %v69 = vld [vmem:[%s0 + $0x108] sm:$0xff]
    %v70 = vld [vmem:[%s0 + $0x110] sm:$0xff]
    %v71 = vld [vmem:[%s0 + $0x118] sm:$0xff]
    %v72 = vld [vmem:[%s0 + $0x120] sm:$0xff]
    %v73 = vld [vmem:[%s0 + $0x128] sm:$0xff]
    %v74 = vld [vmem:[%s0 + $0x130] sm:$0xff]
    %v75 = vld [vmem:[%s0 + $0x138] sm:$0xff]
    %v76 = vld [vmem:[%s0 + $0x140] sm:$0xff]
    %v77 = vld [vmem:[%s0 + $0x148] sm:$0xff]
    %v78 = vld [vmem:[%s0 + $0x150] sm:$0xff]
    %v79 = vld [vmem:[%s0 + $0x158] sm:$0xff]
    %v80 = vld [vmem:[%s0 + $0x160] sm:$0xff]
    %v81 = vld [vmem:[%s0 + $0x168] sm:$0xff]
    %v82 = vld [vmem:[%s0 + $0x170] sm:$0xff]
    %v83 = vld [vmem:[%s0 + $0x178] sm:$0xff]
    %v84 = vld [vmem:[%s0 + $0x180] sm:$0xff]
    %v85 = vld [vmem:[%s0 + $0x188] sm:$0xff]
    %v86 = vld [vmem:[%s0 + $0x190] sm:$0xff]
    %v87 = vld [vmem:[%s0 + $0x198] sm:$0xff]
    %v88 = vld [vmem:[%s0 + $0x1a0] sm:$0xff]
    %v89 = vld [vmem:[%s0 + $0x1a8] sm:$0xff]
    %v90 = vld [vmem:[%s0 + $0x1b0] sm:$0xff]
    %v91 = vld [vmem:[%s0 + $0x1b8] sm:$0xff]
    %v92 = vld [vmem:[%s0 + $0x1c0] sm:$0xff]
    %v93 = vld [vmem:[%s0 + $0x1c8] sm:$0xff]
    %v94 = vld [vmem:[%s0 + $0x1d0] sm:$0xff]
    %v95 = vld [vmem:[%s0 + $0x1d8] sm:$0xff]
    %v96 = vld [vmem:[%s0 + $0x1e0] sm:$0xff]
    %v97 = vld [vmem:[%s0 + $0x1e8] sm:$0xff]
    %v98 = vld [vmem:[%s0 + $0x1f0] sm:$0xff]
    %v99 = vld [vmem:[%s0 + $0x1f8] sm:$0xff]
    %100 = vmatpush.msra.mxu0 %v51
    %101 = vmatpush.msra.mxu0 %v50
    %102 = vmatpush.msra.mxu0 %v49
    %103 = vmatpush.msra.mxu0 %v48
    %104 = vmatpush.msra.mxu0 %v47
    %105 = vmatpush.msra.mxu0 %v46
    %106 = vmatpush.msra.mxu0 %v45
    %107 = vmatpush.msra.mxu0 %v44
    %108 = vmatpush.msra.mxu0 %v43
    %109 = vmatpush.msra.mxu0 %v42
    %110 = vmatpush.msra.mxu0 %v41
    %111 = vmatpush.msra.mxu0 %v40
    %112 = vmatpush.msra.mxu0 %v39
    %113 = vmatpush.msra.mxu0 %v38
    %114 = vmatpush.msra.mxu0 %v37
    %115 = vmatpush.msra.mxu0 %v36
    %116 = vmatmul.f32.gmra.mxu0 %v32
    %v117 = vpop.f32.mrf.mxu0
    %v118 = vadd.f32 0.0, %v117
    %119 = vdwg.mxu0
    %120 = vmatpush.msra.mxu0 %v67
    %121 = vmatpush.msra.mxu0 %v66
    %122 = vmatpush.msra.mxu0 %v65
    %123 = vmatpush.msra.mxu0 %v64
    %124 = vmatpush.msra.mxu0 %v63
    %125 = vmatpush.msra.mxu0 %v62
    %126 = vmatpush.msra.mxu0 %v61
    %127 = vmatpush.msra.mxu0 %v60
    %128 = vmatpush.msra.mxu0 %v59
    %129 = vmatpush.msra.mxu0 %v58
    %130 = vmatpush.msra.mxu0 %v57
    %131 = vmatpush.msra.mxu0 %v56
    %132 = vmatpush.msra.mxu0 %v55
    %133 = vmatpush.msra.mxu0 %v54
    %134 = vmatpush.msra.mxu0 %v53
    %135 = vmatpush.msra.mxu0 %v52
    %136 = vmatmul.f32.gmra.mxu0 %v33
    %v137 = vpop.f32.mrf.mxu0
    %v138 = vadd.f32 %v118, %v137
    %139 = vdwg.mxu0
    %140 = vmatpush.msra.mxu0 %v83
    %141 = vmatpush.msra.mxu0 %v82
    %142 = vmatpush.msra.mxu0 %v81
    %143 = vmatpush.msra.mxu0 %v80
    %144 = vmatpush.msra.mxu0 %v79
    %145 = vmatpush.msra.mxu0 %v78
    %146 = vmatpush.msra.mxu0 %v77
    %147 = vmatpush.msra.mxu0 %v76
    %148 = vmatpush.msra.mxu0 %v75
    %149 = vmatpush.msra.mxu0 %v74
    %150 = vmatpush.msra.mxu0 %v73
    %151 = vmatpush.msra.mxu0 %v72
    %152 = vmatpush.msra.mxu0 %v71
    %153 = vmatpush.msra.mxu0 %v70
    %154 = vmatpush.msra.mxu0 %v69
    %155 = vmatpush.msra.mxu0 %v68
    %156 = vmatmul.f32.gmra.mxu0 %v34
    %v157 = vpop.f32.mrf.mxu0
    %v158 = vadd.f32 %v138, %v157
    %159 = vdwg.mxu0
    %160 = vmatpush.msra.mxu0 %v99
    %161 = vmatpush.msra.mxu0 %v98
    %162 = vmatpush.msra.mxu0 %v97
    %163 = vmatpush.msra.mxu0 %v96
    %164 = vmatpush.msra.mxu0 %v95
    %165 = vmatpush.msra.mxu0 %v94
    %166 = vmatpush.msra.mxu0 %v93
    %167 = vmatpush.msra.mxu0 %v92
    %168 = vmatpush.msra.mxu0 %v91
    %169 = vmatpush.msra.mxu0 %v90
    %170 = vmatpush.msra.mxu0 %v89
    %171 = vmatpush.msra.mxu0 %v88
    %172 = vmatpush.msra.mxu0 %v87
    %173 = vmatpush.msra.mxu0 %v86
    %174 = vmatpush.msra.mxu0 %v85
    %175 = vmatpush.msra.mxu0 %v84
    %176 = vmatmul.f32.gmra.mxu0 %v35
    %v177 = vpop.f32.mrf.mxu0
    %v178 = vadd.f32 %v158, %v177
    %179 = vdwg.mxu0
    %v180 = vld [vmem:[%s1] sm:$0xff]
    %v181 = vld [vmem:[%s1 + $0x8] sm:$0xff]
    %v182 = vld [vmem:[%s1 + $0x10] sm:$0xff]
    %v183 = vld [vmem:[%s1 + $0x18] sm:$0xff]
    %v184 = vld [vmem:[%s1 + $0x20] sm:$0xff]
    %v185 = vld [vmem:[%s1 + $0x28] sm:$0xff]
    %v186 = vld [vmem:[%s1 + $0x30] sm:$0xff]
    %v187 = vld [vmem:[%s1 + $0x38] sm:$0xff]
    %v188 = vld [vmem:[%s1 + $0x40] sm:$0xff]
    %v189 = vld [vmem:[%s1 + $0x48] sm:$0xff]
    %v190 = vld [vmem:[%s1 + $0x50] sm:$0xff]
    %v191 = vld [vmem:[%s1 + $0x58] sm:$0xff]
    %v192 = vld [vmem:[%s1 + $0x60] sm:$0xff]
    %v193 = vld [vmem:[%s1 + $0x68] sm:$0xff]
    %v194 = vld [vmem:[%s1 + $0x70] sm:$0xff]
    %v195 = vld [vmem:[%s1 + $0x78] sm:$0xff]
    %v196 = vld [vmem:[%s1 + $0x80] sm:$0xff]
    %v197 = vld [vmem:[%s1 + $0x88] sm:$0xff]
    %v198 = vld [vmem:[%s1 + $0x90] sm:$0xff]
    %v199 = vld [vmem:[%s1 + $0x98] sm:$0xff]
    %v200 = vld [vmem:[%s1 + $0xa0] sm:$0xff]
    %v201 = vld [vmem:[%s1 + $0xa8] sm:$0xff]
    %v202 = vld [vmem:[%s1 + $0xb0] sm:$0xff]
    %v203 = vld [vmem:[%s1 + $0xb8] sm:$0xff]
    %v204 = vld [vmem:[%s1 + $0xc0] sm:$0xff]
    %v205 = vld [vmem:[%s1 + $0xc8] sm:$0xff]
    %v206 = vld [vmem:[%s1 + $0xd0] sm:$0xff]
    %v207 = vld [vmem:[%s1 + $0xd8] sm:$0xff]
    %v208 = vld [vmem:[%s1 + $0xe0] sm:$0xff]
    %v209 = vld [vmem:[%s1 + $0xe8] sm:$0xff]
    %v210 = vld [vmem:[%s1 + $0xf0] sm:$0xff]
    %v211 = vld [vmem:[%s1 + $0xf8] sm:$0xff]
    %v212 = vld [vmem:[%s1 + $0x100] sm:$0xff]
    %v213 = vld [vmem:[%s1 + $0x108] sm:$0xff]
    %v214 = vld [vmem:[%s1 + $0x110] sm:$0xff]
    %v215 = vld [vmem:[%s1 + $0x118] sm:$0xff]
    %v216 = vld [vmem:[%s1 + $0x120] sm:$0xff]
    %v217 = vld [vmem:[%s1 + $0x128] sm:$0xff]
    %v218 = vld [vmem:[%s1 + $0x130] sm:$0xff]
    %v219 = vld [vmem:[%s1 + $0x138] sm:$0xff]
    %v220 = vld [vmem:[%s1 + $0x140] sm:$0xff]
    %v221 = vld [vmem:[%s1 + $0x148] sm:$0xff]
    %v222 = vld [vmem:[%s1 + $0x150] sm:$0xff]
    %v223 = vld [vmem:[%s1 + $0x158] sm:$0xff]
    %v224 = vld [vmem:[%s1 + $0x160] sm:$0xff]
    %v225 = vld [vmem:[%s1 + $0x168] sm:$0xff]
    %v226 = vld [vmem:[%s1 + $0x170] sm:$0xff]
    %v227 = vld [vmem:[%s1 + $0x178] sm:$0xff]
    %v228 = vld [vmem:[%s1 + $0x180] sm:$0xff]
    %v229 = vld [vmem:[%s1 + $0x188] sm:$0xff]
    %v230 = vld [vmem:[%s1 + $0x190] sm:$0xff]
    %v231 = vld [vmem:[%s1 + $0x198] sm:$0xff]
    %v232 = vld [vmem:[%s1 + $0x1a0] sm:$0xff]
    %v233 = vld [vmem:[%s1 + $0x1a8] sm:$0xff]
    %v234 = vld [vmem:[%s1 + $0x1b0] sm:$0xff]
    %v235 = vld [vmem:[%s1 + $0x1b8] sm:$0xff]
    %v236 = vld [vmem:[%s1 + $0x1c0] sm:$0xff]
    %v237 = vld [vmem:[%s1 + $0x1c8] sm:$0xff]
    %v238 = vld [vmem:[%s1 + $0x1d0] sm:$0xff]
    %v239 = vld [vmem:[%s1 + $0x1d8] sm:$0xff]
    %v240 = vld [vmem:[%s1 + $0x1e0] sm:$0xff]
    %v241 = vld [vmem:[%s1 + $0x1e8] sm:$0xff]
    %v242 = vld [vmem:[%s1 + $0x1f0] sm:$0xff]
    %v243 = vld [vmem:[%s1 + $0x1f8] sm:$0xff]
    %v244 = vld [vmem:[#allocation2] sm:$0xff]
    %v245 = vmul.f32 %v244, %v178
    %vm246 = vcmask 64512
    %v248 = vsel %vm246, %v180, 0
    %v251 = vsel %vm246, %v181, 0
    %v254 = vsel %vm246, %v182, 0
    %v257 = vsel %vm246, %v183, 0
    %v260 = vsel %vm246, %v184, 0
    %v263 = vsel %vm246, %v185, 0
    %v266 = vsel %vm246, %v186, 0
    %v269 = vsel %vm246, %v187, 0
    %v272 = vsel %vm246, %v188, 0
    %v275 = vsel %vm246, %v189, 0
    %v278 = vsel %vm246, %v190, 0
    %v281 = vsel %vm246, %v191, 0
    %v284 = vsel %vm246, %v192, 0
    %v287 = vsel %vm246, %v193, 0
    %v290 = vsel %vm246, %v194, 0
    %v293 = vsel %vm246, %v195, 0
    %v296 = vsel %vm246, %v196, 0
    %v299 = vsel %vm246, %v197, 0
    %v302 = vsel %vm246, %v198, 0
    %v305 = vsel %vm246, %v199, 0
    %v308 = vsel %vm246, %v200, 0
    %v311 = vsel %vm246, %v201, 0
    %v314 = vsel %vm246, %v202, 0
    %v317 = vsel %vm246, %v203, 0
    %v320 = vsel %vm246, %v204, 0
    %v323 = vsel %vm246, %v205, 0
    %v326 = vsel %vm246, %v206, 0
    %v329 = vsel %vm246, %v207, 0
    %v332 = vsel %vm246, %v208, 0
    %v335 = vsel %vm246, %v209, 0
    %v338 = vsel %vm246, %v210, 0
    %v341 = vsel %vm246, %v211, 0
    %v344 = vsel %vm246, %v212, 0
    %v347 = vsel %vm246, %v213, 0
    %v350 = vsel %vm246, %v214, 0
    %v353 = vsel %vm246, %v215, 0
    %v356 = vsel %vm246, %v216, 0
    %v359 = vsel %vm246, %v217, 0
    %v362 = vsel %vm246, %v218, 0
    %v365 = vsel %vm246, %v219, 0
    %v368 = vsel %vm246, %v220, 0
    %v371 = vsel %vm246, %v221, 0
    %v374 = vsel %vm246, %v222, 0
    %v377 = vsel %vm246, %v223, 0
    %v380 = vsel %vm246, %v224, 0
    %v383 = vsel %vm246, %v225, 0
    %v386 = vsel %vm246, %v226, 0
    %v389 = vsel %vm246, %v227, 0
    %v392 = vsel %vm246, %v228, 0
    %v395 = vsel %vm246, %v229, 0
    %v398 = vsel %vm246, %v230, 0
    %v401 = vsel %vm246, %v231, 0
    %v404 = vsel %vm246, %v232, 0
    %v407 = vsel %vm246, %v233, 0
    %v410 = vsel %vm246, %v234, 0
    %v413 = vsel %vm246, %v235, 0
    %v416 = vsel %vm246, %v236, 0
    %v419 = vsel %vm246, %v237, 0
    %v422 = vsel %vm246, %v238, 0
    %v425 = vsel %vm246, %v239, 0
    %v428 = vsel %vm246, %v240, 0
    %v431 = vsel %vm246, %v241, 0
    %v434 = vsel %vm246, %v242, 0
    %v437 = vsel %vm246, %v243, 0
    %439 = vmatpush.msra.mxu0 0.0
    %440 = vmatpush.msra.mxu0 0.0
    %441 = vmatpush.msra.mxu0 0.0
    %442 = vmatpush.msra.mxu0 0.0
    %443 = vmatpush.msra.mxu0 0.0
    %444 = vmatpush.msra.mxu0 0.0
    %445 = vmatpush.msra.mxu0 0.0
    %446 = vmatpush.msra.mxu0 0.0
    %447 = vmatpush.msra.mxu0 0.0
    %448 = vmatpush.msra.mxu0 0.0
    %449 = vmatpush.msra.mxu0 0.0
    %450 = vmatpush.msra.mxu0 0.0
    %451 = vmatpush.msra.mxu0 0.0
    %452 = vmatpush.msra.mxu0 0.0
    %453 = vmatpush.msra.mxu0 0.0
    %454 = vmatpush.msra.mxu0 %v245
    %455 = vmatmul.f32.gmra.mxu0 %v248
    %v456 = vpop.f32.mrf.mxu0
    %v457 = vadd.f32 0.0, %v456
    %458 = vmatmul.f32.gmra.mxu0 %v251
    %v459 = vpop.f32.mrf.mxu0
    %v460 = vadd.f32 0.0, %v459
    %461 = vmatmul.f32.gmra.mxu0 %v254
    %v462 = vpop.f32.mrf.mxu0
    %v463 = vadd.f32 0.0, %v462
    %464 = vmatmul.f32.gmra.mxu0 %v257
    %v465 = vpop.f32.mrf.mxu0
    %v466 = vadd.f32 0.0, %v465
    %467 = vmatmul.f32.gmra.mxu0 %v260
    %v468 = vpop.f32.mrf.mxu0
    %v469 = vadd.f32 0.0, %v468
    %470 = vmatmul.f32.gmra.mxu0 %v263
    %v471 = vpop.f32.mrf.mxu0
    %v472 = vadd.f32 0.0, %v471
    %473 = vmatmul.f32.gmra.mxu0 %v266
    %v474 = vpop.f32.mrf.mxu0
    %v475 = vadd.f32 0.0, %v474
    %476 = vmatmul.f32.gmra.mxu0 %v269
    %v477 = vpop.f32.mrf.mxu0
    %v478 = vadd.f32 0.0, %v477
    %479 = vmatmul.f32.gmra.mxu0 %v272
    %v480 = vpop.f32.mrf.mxu0
    %v481 = vadd.f32 0.0, %v480
    %482 = vmatmul.f32.gmra.mxu0 %v275
    %v483 = vpop.f32.mrf.mxu0
    %v484 = vadd.f32 0.0, %v483
    %485 = vmatmul.f32.gmra.mxu0 %v278
    %v486 = vpop.f32.mrf.mxu0
    %v487 = vadd.f32 0.0, %v486
    %488 = vmatmul.f32.gmra.mxu0 %v281
    %v489 = vpop.f32.mrf.mxu0
    %v490 = vadd.f32 0.0, %v489
    %491 = vmatmul.f32.gmra.mxu0 %v284
    %v492 = vpop.f32.mrf.mxu0
    %v493 = vadd.f32 0.0, %v492
    %494 = vmatmul.f32.gmra.mxu0 %v287
    %v495 = vpop.f32.mrf.mxu0
    %v496 = vadd.f32 0.0, %v495
    %497 = vmatmul.f32.gmra.mxu0 %v290
    %v498 = vpop.f32.mrf.mxu0
    %v499 = vadd.f32 0.0, %v498
    %500 = vmatmul.f32.gmra.mxu0 %v293
    %v501 = vpop.f32.mrf.mxu0
    %v502 = vadd.f32 0.0, %v501
    %503 = vmatmul.f32.gmra.mxu0 %v296
    %v504 = vpop.f32.mrf.mxu0
    %v505 = vadd.f32 0.0, %v504
    %506 = vmatmul.f32.gmra.mxu0 %v299
    %v507 = vpop.f32.mrf.mxu0
    %v508 = vadd.f32 0.0, %v507
    %509 = vmatmul.f32.gmra.mxu0 %v302
    %v510 = vpop.f32.mrf.mxu0
    %v511 = vadd.f32 0.0, %v510
    %512 = vmatmul.f32.gmra.mxu0 %v305
    %v513 = vpop.f32.mrf.mxu0
    %v514 = vadd.f32 0.0, %v513
    %515 = vmatmul.f32.gmra.mxu0 %v308
    %v516 = vpop.f32.mrf.mxu0
    %v517 = vadd.f32 0.0, %v516
    %518 = vmatmul.f32.gmra.mxu0 %v311
    %v519 = vpop.f32.mrf.mxu0
    %v520 = vadd.f32 0.0, %v519
    %521 = vmatmul.f32.gmra.mxu0 %v314
    %v522 = vpop.f32.mrf.mxu0
    %v523 = vadd.f32 0.0, %v522
    %524 = vmatmul.f32.gmra.mxu0 %v317
    %v525 = vpop.f32.mrf.mxu0
    %v526 = vadd.f32 0.0, %v525
    %527 = vmatmul.f32.gmra.mxu0 %v320
    %v528 = vpop.f32.mrf.mxu0
    %v529 = vadd.f32 0.0, %v528
    %530 = vmatmul.f32.gmra.mxu0 %v323
    %v531 = vpop.f32.mrf.mxu0
    %v532 = vadd.f32 0.0, %v531
    %533 = vmatmul.f32.gmra.mxu0 %v326
    %v534 = vpop.f32.mrf.mxu0
    %v535 = vadd.f32 0.0, %v534
    %536 = vmatmul.f32.gmra.mxu0 %v329
    %v537 = vpop.f32.mrf.mxu0
    %v538 = vadd.f32 0.0, %v537
    %539 = vmatmul.f32.gmra.mxu0 %v332
    %v540 = vpop.f32.mrf.mxu0
    %v541 = vadd.f32 0.0, %v540
    %542 = vmatmul.f32.gmra.mxu0 %v335
    %v543 = vpop.f32.mrf.mxu0
    %v544 = vadd.f32 0.0, %v543
    %545 = vmatmul.f32.gmra.mxu0 %v338
    %v546 = vpop.f32.mrf.mxu0
    %v547 = vadd.f32 0.0, %v546
    %548 = vmatmul.f32.gmra.mxu0 %v341
    %v549 = vpop.f32.mrf.mxu0
    %v550 = vadd.f32 0.0, %v549
    %551 = vmatmul.f32.gmra.mxu0 %v344
    %v552 = vpop.f32.mrf.mxu0
    %v553 = vadd.f32 0.0, %v552
    %554 = vmatmul.f32.gmra.mxu0 %v347
    %v555 = vpop.f32.mrf.mxu0
    %v556 = vadd.f32 0.0, %v555
    %557 = vmatmul.f32.gmra.mxu0 %v350
    %v558 = vpop.f32.mrf.mxu0
    %v559 = vadd.f32 0.0, %v558
    %560 = vmatmul.f32.gmra.mxu0 %v353
    %v561 = vpop.f32.mrf.mxu0
    %v562 = vadd.f32 0.0, %v561
    %563 = vmatmul.f32.gmra.mxu0 %v356
    %v564 = vpop.f32.mrf.mxu0
    %v565 = vadd.f32 0.0, %v564
    %566 = vmatmul.f32.gmra.mxu0 %v359
    %v567 = vpop.f32.mrf.mxu0
    %v568 = vadd.f32 0.0, %v567
    %569 = vmatmul.f32.gmra.mxu0 %v362
    %v570 = vpop.f32.mrf.mxu0
    %v571 = vadd.f32 0.0, %v570
    %572 = vmatmul.f32.gmra.mxu0 %v365
    %v573 = vpop.f32.mrf.mxu0
    %v574 = vadd.f32 0.0, %v573
    %575 = vmatmul.f32.gmra.mxu0 %v368
    %v576 = vpop.f32.mrf.mxu0
    %v577 = vadd.f32 0.0, %v576
    %578 = vmatmul.f32.gmra.mxu0 %v371
    %v579 = vpop.f32.mrf.mxu0
    %v580 = vadd.f32 0.0, %v579
    %581 = vmatmul.f32.gmra.mxu0 %v374
    %v582 = vpop.f32.mrf.mxu0
    %v583 = vadd.f32 0.0, %v582
    %584 = vmatmul.f32.gmra.mxu0 %v377
    %v585 = vpop.f32.mrf.mxu0
    %v586 = vadd.f32 0.0, %v585
    %587 = vmatmul.f32.gmra.mxu0 %v380
    %v588 = vpop.f32.mrf.mxu0
    %v589 = vadd.f32 0.0, %v588
    %590 = vmatmul.f32.gmra.mxu0 %v383
    %v591 = vpop.f32.mrf.mxu0
    %v592 = vadd.f32 0.0, %v591
    %593 = vmatmul.f32.gmra.mxu0 %v386
    %v594 = vpop.f32.mrf.mxu0
    %v595 = vadd.f32 0.0, %v594
    %596 = vmatmul.f32.gmra.mxu0 %v389
    %v597 = vpop.f32.mrf.mxu0
    %v598 = vadd.f32 0.0, %v597
    %599 = vmatmul.f32.gmra.mxu0 %v392
    %v600 = vpop.f32.mrf.mxu0
    %v601 = vadd.f32 0.0, %v600
    %602 = vmatmul.f32.gmra.mxu0 %v395
    %v603 = vpop.f32.mrf.mxu0
    %v604 = vadd.f32 0.0, %v603
    %605 = vmatmul.f32.gmra.mxu0 %v398
    %v606 = vpop.f32.mrf.mxu0
    %v607 = vadd.f32 0.0, %v606
    %608 = vmatmul.f32.gmra.mxu0 %v401
    %v609 = vpop.f32.mrf.mxu0
    %v610 = vadd.f32 0.0, %v609
    %611 = vmatmul.f32.gmra.mxu0 %v404
    %v612 = vpop.f32.mrf.mxu0
    %v613 = vadd.f32 0.0, %v612
    %614 = vmatmul.f32.gmra.mxu0 %v407
    %v615 = vpop.f32.mrf.mxu0
    %v616 = vadd.f32 0.0, %v615
    %617 = vmatmul.f32.gmra.mxu0 %v410
    %v618 = vpop.f32.mrf.mxu0
    %v619 = vadd.f32 0.0, %v618
    %620 = vmatmul.f32.gmra.mxu0 %v413
    %v621 = vpop.f32.mrf.mxu0
    %v622 = vadd.f32 0.0, %v621
    %623 = vmatmul.f32.gmra.mxu0 %v416
    %v624 = vpop.f32.mrf.mxu0
    %v625 = vadd.f32 0.0, %v624
    %626 = vmatmul.f32.gmra.mxu0 %v419
    %v627 = vpop.f32.mrf.mxu0
    %v628 = vadd.f32 0.0, %v627
    %629 = vmatmul.f32.gmra.mxu0 %v422
    %v630 = vpop.f32.mrf.mxu0
    %v631 = vadd.f32 0.0, %v630
    %632 = vmatmul.f32.gmra.mxu0 %v425
    %v633 = vpop.f32.mrf.mxu0
    %v634 = vadd.f32 0.0, %v633
    %635 = vmatmul.f32.gmra.mxu0 %v428
    %v636 = vpop.f32.mrf.mxu0
    %v637 = vadd.f32 0.0, %v636
    %638 = vmatmul.f32.gmra.mxu0 %v431
    %v639 = vpop.f32.mrf.mxu0
    %v640 = vadd.f32 0.0, %v639
    %641 = vmatmul.f32.gmra.mxu0 %v434
    %v642 = vpop.f32.mrf.mxu0
    %v643 = vadd.f32 0.0, %v642
    %644 = vmatmul.f32.gmra.mxu0 %v437
    %v645 = vpop.f32.mrf.mxu0
    %v646 = vadd.f32 0.0, %v645
    %647 = vdwg.mxu0
    %v648 = vpack.c.bf16 %v457, %v457
    %v649 = vpack.c.bf16 %v460, %v460
    %v650 = vpack.c.bf16 %v463, %v463
    %v651 = vpack.c.bf16 %v466, %v466
    %v652 = vpack.c.bf16 %v469, %v469
    %v653 = vpack.c.bf16 %v472, %v472
    %v654 = vpack.c.bf16 %v475, %v475
    %v655 = vpack.c.bf16 %v478, %v478
    %v656 = vpack.c.bf16 %v481, %v481
    %v657 = vpack.c.bf16 %v484, %v484
    %v658 = vpack.c.bf16 %v487, %v487
    %v659 = vpack.c.bf16 %v490, %v490
    %v660 = vpack.c.bf16 %v493, %v493
    %v661 = vpack.c.bf16 %v496, %v496
    %v662 = vpack.c.bf16 %v499, %v499
    %v663 = vpack.c.bf16 %v502, %v502
    %v664 = vpack.c.bf16 %v505, %v505
    %v665 = vpack.c.bf16 %v508, %v508
    %v666 = vpack.c.bf16 %v511, %v511
    %v667 = vpack.c.bf16 %v514, %v514
    %v668 = vpack.c.bf16 %v517, %v517
    %v669 = vpack.c.bf16 %v520, %v520
    %v670 = vpack.c.bf16 %v523, %v523
    %v671 = vpack.c.bf16 %v526, %v526
    %v672 = vpack.c.bf16 %v529, %v529
    %v673 = vpack.c.bf16 %v532, %v532
    %v674 = vpack.c.bf16 %v535, %v535
    %v675 = vpack.c.bf16 %v538, %v538
    %v676 = vpack.c.bf16 %v541, %v541
    %v677 = vpack.c.bf16 %v544, %v544
    %v678 = vpack.c.bf16 %v547, %v547
    %v679 = vpack.c.bf16 %v550, %v550
    %v680 = vpack.c.bf16 %v553, %v553
    %v681 = vpack.c.bf16 %v556, %v556
    %v682 = vpack.c.bf16 %v559, %v559
    %v683 = vpack.c.bf16 %v562, %v562
    %v684 = vpack.c.bf16 %v565, %v565
    %v685 = vpack.c.bf16 %v568, %v568
    %v686 = vpack.c.bf16 %v571, %v571
    %v687 = vpack.c.bf16 %v574, %v574
    %v688 = vpack.c.bf16 %v577, %v577
    %v689 = vpack.c.bf16 %v580, %v580
    %v690 = vpack.c.bf16 %v583, %v583
    %v691 = vpack.c.bf16 %v586, %v586
    %v692 = vpack.c.bf16 %v589, %v589
    %v693 = vpack.c.bf16 %v592, %v592
    %v694 = vpack.c.bf16 %v595, %v595
    %v695 = vpack.c.bf16 %v598, %v598
    %v696 = vpack.c.bf16 %v601, %v601
    %v697 = vpack.c.bf16 %v604, %v604
    %v698 = vpack.c.bf16 %v607, %v607
    %v699 = vpack.c.bf16 %v610, %v610
    %v700 = vpack.c.bf16 %v613, %v613
    %v701 = vpack.c.bf16 %v616, %v616
    %v702 = vpack.c.bf16 %v619, %v619
    %v703 = vpack.c.bf16 %v622, %v622
    %v704 = vpack.c.bf16 %v625, %v625
    %v705 = vpack.c.bf16 %v628, %v628
    %v706 = vpack.c.bf16 %v631, %v631
    %v707 = vpack.c.bf16 %v634, %v634
    %v708 = vpack.c.bf16 %v637, %v637
    %v709 = vpack.c.bf16 %v640, %v640
    %v710 = vpack.c.bf16 %v643, %v643
    %v711 = vpack.c.bf16 %v646, %v646
    %712 = vst [vmem:[#allocation5] sm:$0xf] %v648
    %713 = vst [vmem:[#allocation5 + $0x4] sm:$0xf] %v649
    %714 = vst [vmem:[#allocation5 + $0x8] sm:$0xf] %v650
    %715 = vst [vmem:[#allocation5 + $0xc] sm:$0xf] %v651
    %716 = vst [vmem:[#allocation5 + $0x10] sm:$0xf] %v652
    %717 = vst [vmem:[#allocation5 + $0x14] sm:$0xf] %v653
    %718 = vst [vmem:[#allocation5 + $0x18] sm:$0xf] %v654
    %719 = vst [vmem:[#allocation5 + $0x1c] sm:$0xf] %v655
    %720 = vst [vmem:[#allocation5 + $0x20] sm:$0xf] %v656
    %721 = vst [vmem:[#allocation5 + $0x24] sm:$0xf] %v657
    %722 = vst [vmem:[#allocation5 + $0x28] sm:$0xf] %v658
    %723 = vst [vmem:[#allocation5 + $0x2c] sm:$0xf] %v659
    %724 = vst [vmem:[#allocation5 + $0x30] sm:$0xf] %v660
    %725 = vst [vmem:[#allocation5 + $0x34] sm:$0xf] %v661
    %726 = vst [vmem:[#allocation5 + $0x38] sm:$0xf] %v662
    %727 = vst [vmem:[#allocation5 + $0x3c] sm:$0xf] %v663
    %728 = vst [vmem:[#allocation5 + $0x40] sm:$0xf] %v664
    %729 = vst [vmem:[#allocation5 + $0x44] sm:$0xf] %v665
    %730 = vst [vmem:[#allocation5 + $0x48] sm:$0xf] %v666
    %731 = vst [vmem:[#allocation5 + $0x4c] sm:$0xf] %v667
    %732 = vst [vmem:[#allocation5 + $0x50] sm:$0xf] %v668
    %733 = vst [vmem:[#allocation5 + $0x54] sm:$0xf] %v669
    %734 = vst [vmem:[#allocation5 + $0x58] sm:$0xf] %v670
    %735 = vst [vmem:[#allocation5 + $0x5c] sm:$0xf] %v671
    %736 = vst [vmem:[#allocation5 + $0x60] sm:$0xf] %v672
    %737 = vst [vmem:[#allocation5 + $0x64] sm:$0xf] %v673
    %738 = vst [vmem:[#allocation5 + $0x68] sm:$0xf] %v674
    %739 = vst [vmem:[#allocation5 + $0x6c] sm:$0xf] %v675
    %740 = vst [vmem:[#allocation5 + $0x70] sm:$0xf] %v676
    %741 = vst [vmem:[#allocation5 + $0x74] sm:$0xf] %v677
    %742 = vst [vmem:[#allocation5 + $0x78] sm:$0xf] %v678
    %743 = vst [vmem:[#allocation5 + $0x7c] sm:$0xf] %v679
    %744 = vst [vmem:[#allocation5 + $0x80] sm:$0xf] %v680
    %745 = vst [vmem:[#allocation5 + $0x84] sm:$0xf] %v681
    %746 = vst [vmem:[#allocation5 + $0x88] sm:$0xf] %v682
    %747 = vst [vmem:[#allocation5 + $0x8c] sm:$0xf] %v683
    %748 = vst [vmem:[#allocation5 + $0x90] sm:$0xf] %v684
    %749 = vst [vmem:[#allocation5 + $0x94] sm:$0xf] %v685
    %750 = vst [vmem:[#allocation5 + $0x98] sm:$0xf] %v686
    %751 = vst [vmem:[#allocation5 + $0x9c] sm:$0xf] %v687
    %752 = vst [vmem:[#allocation5 + $0xa0] sm:$0xf] %v688
    %753 = vst [vmem:[#allocation5 + $0xa4] sm:$0xf] %v689
    %754 = vst [vmem:[#allocation5 + $0xa8] sm:$0xf] %v690
    %755 = vst [vmem:[#allocation5 + $0xac] sm:$0xf] %v691
    %756 = vst [vmem:[#allocation5 + $0xb0] sm:$0xf] %v692
    %757 = vst [vmem:[#allocation5 + $0xb4] sm:$0xf] %v693
    %758 = vst [vmem:[#allocation5 + $0xb8] sm:$0xf] %v694
    %759 = vst [vmem:[#allocation5 + $0xbc] sm:$0xf] %v695
    %760 = vst [vmem:[#allocation5 + $0xc0] sm:$0xf] %v696
    %761 = vst [vmem:[#allocation5 + $0xc4] sm:$0xf] %v697
    %762 = vst [vmem:[#allocation5 + $0xc8] sm:$0xf] %v698
    %763 = vst [vmem:[#allocation5 + $0xcc] sm:$0xf] %v699
    %764 = vst [vmem:[#allocation5 + $0xd0] sm:$0xf] %v700
    %765 = vst [vmem:[#allocation5 + $0xd4] sm:$0xf] %v701
    %766 = vst [vmem:[#allocation5 + $0xd8] sm:$0xf] %v702
    %767 = vst [vmem:[#allocation5 + $0xdc] sm:$0xf] %v703
    %768 = vst [vmem:[#allocation5 + $0xe0] sm:$0xf] %v704
    %769 = vst [vmem:[#allocation5 + $0xe4] sm:$0xf] %v705
    %770 = vst [vmem:[#allocation5 + $0xe8] sm:$0xf] %v706
    %771 = vst [vmem:[#allocation5 + $0xec] sm:$0xf] %v707
    %772 = vst [vmem:[#allocation5 + $0xf0] sm:$0xf] %v708
    %773 = vst [vmem:[#allocation5 + $0xf4] sm:$0xf] %v709
    %774 = vst [vmem:[#allocation5 + $0xf8] sm:$0xf] %v710
    %775 = vst [vmem:[#allocation5 + $0xfc] sm:$0xf] %v711
    // Predicated region
    $region22: #{tpu_custom_call.1} parent=1 // pred_check
      _
    $region23: #{tpu_custom_call.1} parent=1 // pred_check_branch
      %777 = sbr.rel (0) target = $region25
    $region24: #{tpu_custom_call.1} parent=1 // pred_region
      %779 = vsyncadd [#allocation4], 0
      %s780 = sshll.u32 [#allocation5], 4
      %s781 = int_to_ptr.vmem [resolvable:$true] %s780
      %s782 = sshll.u32 %s4, 4
      %s783 = int_to_ptr.hbm [resolvable:$true] %s782
      %788 = dma.vmem_to_hbm [thread:$0]  %s781, 4096, %s783, [#allocation4], 64, 64, 4
    $region25: #{tpu_custom_call.1} parent=1 // pred_fallthru
      _
    // Predicated region
    $region26: #{tpu_custom_call.1} parent=1 // pred_check
      _
    $region27: #{tpu_custom_call.1} parent=1 // pred_check_branch
      %790 = sbr.rel (0) target = $region29
    $region28: #{tpu_custom_call.1} parent=1 // pred_region
      %792 = dma.done [#allocation4], 4096
    $region29: #{tpu_custom_call.1} parent=1 // pred_fallthru
      _
    %793 = vsyncpa [#allocation3], 1
    %794 = vsyncpa [#allocation4], 1

</llo_original>
